<compile_context>
chip_gen: v6e
topology: v6e:2x2x1
jax: 0.10.0
libtpu: 0.0.40
codegen_flags: <defaults>
</compile_context>

<pallas_src>
import jax
import jax.numpy as jnp
from jax.experimental import pallas as pl
from jax.experimental.pallas import tpu as pltpu

HIDDEN = 32        # stand-in for camembert.config.hidden_size
H_PAD = 128        # lane-padded hidden width (pooled activations)
FC_HIDDEN = 128
N_CLASSES = 2
OUT_LANES = 128    # lane-dense output width (N_CLASSES zero-padded to 128)
VOCAB = 64
SEQ = 8
BATCH = 2
SUBLANE = 8        # f32 sublane tile


def classifier_kernel(ids_ref, table_ref, w_ref, b_ref, out_ref, pooled_ref):
    """Fused CLS row-gather + classifier head.

    ids_ref    : [Bp]                 int32  CLS token ids (SMEM)
    table_ref  : [VOCAB, 128]         f32    precomputed tanh(E @ Wp + bp), lane-padded
    w_ref      : [256, 128]           bf16   rows 0..127 = folded+padded fc[0] weight,
                                             rows 128..255 = padded fc[2] weight
    b_ref      : [2, 128]             f32    row 0 = fc[0] bias, row 1 = padded fc[2] bias
    out_ref    : [Bp, 128]            f32    lane-dense logits (only [:, :2] meaningful)
    pooled_ref : [Bp, 128]            f32    VMEM scratch for the gathered pooled rows
    """
    bp = out_ref.shape[0]

    # --- CLS pooled-state gather via SMEM scalar ids (no one-hot MXU pass) ---
    for b in range(bp):                              # bp is small & static
        idx = ids_ref[b]
        pooled_ref[pl.ds(b, 1), :] = table_ref[pl.ds(idx, 1), :]
    pooled = pooled_ref[...].astype(jnp.bfloat16)    # [Bp, 128]

    # --- fc: Linear(3H, 128) -> ReLU -> Linear(128, 2) ------------------------
    # The reference concatenates the SAME pooled tensor three times, so the
    # folded weight p @ (W1[:H]+W1[H:2H]+W1[2H:]) is exact (precomputed in prep).
    w1 = w_ref[0:H_PAD, :]                           # [128, 128] bf16 (rows >= H zero)
    w2 = w_ref[H_PAD:, :]                            # [128, 128] bf16 (cols >= 2 zero)

    h = jnp.dot(pooled, w1, preferred_element_type=jnp.float32) + b_ref[0:1, :]
    h = jnp.maximum(h, 0.0)
    logits = jnp.dot(h.astype(jnp.bfloat16), w2,
                     preferred_element_type=jnp.float32) + b_ref[1:2, :]

    out_ref[...] = logits                            # full-lane unmasked store


def prepare_params(params):
    """One-time prep: fold embedding->pooler into a pooled table, fold fc1 over
    the 3-way concat, lane-pad everything to 128, pack weights & biases."""
    h = params["pooler_w"].shape[0]

    # Embedding + pooler fold (exact for the stand-in encoder).
    pooled_table = jnp.tanh(params["embedding"] @ params["pooler_w"]
                            + params["pooler_b"])                      # [V, H] f32
    table_pad = jnp.zeros((VOCAB, H_PAD), jnp.float32)
    table_pad = table_pad.at[:, :h].set(pooled_table)

    # fc1 concat fold + lane/row padding.
    w1 = params["fc1_w"]
    w1_folded = w1[:h] + w1[h:2 * h] + w1[2 * h:]                      # [H, 128]
    w1_pad = jnp.zeros((H_PAD, FC_HIDDEN), jnp.float32).at[:h, :].set(w1_folded)
    w2_pad = jnp.zeros((FC_HIDDEN, OUT_LANES), jnp.float32)
    w2_pad = w2_pad.at[:, :N_CLASSES].set(params["fc2_w"])
    w_packed = jnp.concatenate([w1_pad, w2_pad], axis=0).astype(jnp.bfloat16)

    b_packed = jnp.zeros((2, OUT_LANES), jnp.float32)
    b_packed = b_packed.at[0, :FC_HIDDEN].set(params["fc1_b"][0])
    b_packed = b_packed.at[1, :N_CLASSES].set(params["fc2_b"][0])

    return {"pooled_table": table_pad, "w_packed": w_packed, "b_packed": b_packed}


def hypothesis_classifier_forward(prepared,
                                  input_ids1, attention_mask1,
                                  input_ids2, attention_mask2,
                                  input_ids3, attention_mask3):
    """Mirrors HypothesisClassifier.forward."""
    # Masks are only consumed inside the (not re-implemented) transformer
    # stack; the reference also runs camembert on ids2/ids3 but never uses
    # those pooled outputs, so with a pure stand-in encoder they are dead code.
    del attention_mask1, attention_mask2, attention_mask3
    del input_ids2, input_ids3

    b = input_ids1.shape[0]
    bp = ((b + SUBLANE - 1) // SUBLANE) * SUBLANE        # pad batch to sublane tile
    cls_ids = input_ids1[:, 0].astype(jnp.int32)                      # [B]
    cls_ids = jnp.pad(cls_ids, (0, bp - b))                           # [Bp]

    smem = pl.BlockSpec(memory_space=pltpu.MemorySpace.SMEM)
    vmem = pl.BlockSpec(memory_space=pltpu.MemorySpace.VMEM)

    cost = pl.CostEstimate(
        flops=2 * bp * (H_PAD * FC_HIDDEN + FC_HIDDEN * OUT_LANES),
        transcendentals=0,
        bytes_accessed=(cls_ids.size * 4
                        + prepared["pooled_table"].size * 4
                        + prepared["w_packed"].size * 2
                        + prepared["b_packed"].size * 4
                        + bp * OUT_LANES * 4))

    logits_full = pl.pallas_call(
        classifier_kernel,
        out_shape=jax.ShapeDtypeStruct((bp, OUT_LANES), jnp.float32),
        in_specs=[smem, vmem, vmem, vmem],
        out_specs=vmem,
        scratch_shapes=[pltpu.VMEM((bp, H_PAD), jnp.float32)],
        cost_estimate=cost,
    )(cls_ids,
      prepared["pooled_table"],
      prepared["w_packed"],
      prepared["b_packed"])

    return logits_full[:b, :N_CLASSES]


def init_params(key):
    ks = jax.random.split(key, 7)
    scale = 0.02
    return {
        "embedding": scale * jax.random.normal(ks[0], (VOCAB, HIDDEN), jnp.float32),
        "pooler_w": scale * jax.random.normal(ks[1], (HIDDEN, HIDDEN), jnp.float32),
        "pooler_b": scale * jax.random.normal(ks[2], (1, HIDDEN), jnp.float32),
        "fc1_w": scale * jax.random.normal(ks[3], (3 * HIDDEN, FC_HIDDEN), jnp.float32),
        "fc1_b": scale * jax.random.normal(ks[4], (1, FC_HIDDEN), jnp.float32),
        "fc2_w": scale * jax.random.normal(ks[5], (FC_HIDDEN, N_CLASSES), jnp.float32),
        "fc2_b": scale * jax.random.normal(ks[6], (1, N_CLASSES), jnp.float32),
    }


def _reference_mirror(prepared, ids1):
    """Pure-JAX mirror of the kernel math (same bf16 rounding points)."""
    pooled = jnp.take(prepared["pooled_table"], ids1[:, 0], axis=0)     # [B, 128] f32
    pooled = pooled.astype(jnp.bfloat16).astype(jnp.float32)
    w1 = prepared["w_packed"][:H_PAD].astype(jnp.float32)
    w2 = prepared["w_packed"][H_PAD:].astype(jnp.float32)
    h = pooled @ w1 + prepared["b_packed"][0:1, :]
    h = jnp.maximum(h, 0.0)
    logits = h.astype(jnp.bfloat16).astype(jnp.float32) @ w2 + prepared["b_packed"][1:2, :]
    return logits[:, :N_CLASSES]


def _reference_spec(params, ids1):
    """Pure-f32 reference with the original spec structure (real pooler,
    triple concat, unfolded fc1, unpadded fc2)."""
    cls = jnp.take(params["embedding"], ids1[:, 0], axis=0)
    pooled = jnp.tanh(cls @ params["pooler_w"] + params["pooler_b"])
    concat = jnp.concatenate([pooled, pooled, pooled], axis=1)
    h = jnp.maximum(concat @ params["fc1_w"] + params["fc1_b"], 0.0)
    return h @ params["fc2_w"] + params["fc2_b"]


if __name__ == "__main__":
    key = jax.random.PRNGKey(0)
    pkey, k1, k2, k3 = jax.random.split(key, 4)
    params = init_params(pkey)
    prepared = prepare_params(params)

    input_ids1 = jax.random.randint(k1, (BATCH, SEQ), 0, VOCAB, jnp.int32)
    input_ids2 = jax.random.randint(k2, (BATCH, SEQ), 0, VOCAB, jnp.int32)
    input_ids3 = jax.random.randint(k3, (BATCH, SEQ), 0, VOCAB, jnp.int32)
    attention_mask1 = jnp.ones((BATCH, SEQ), jnp.int32)
    attention_mask2 = jnp.ones((BATCH, SEQ), jnp.int32)
    attention_mask3 = jnp.ones((BATCH, SEQ), jnp.int32)

    fwd = jax.jit(hypothesis_classifier_forward)
    logits = fwd(prepared,
                 input_ids1, attention_mask1,
                 input_ids2, attention_mask2,
                 input_ids3, attention_mask3)
    logits = jax.block_until_ready(logits)

    ref_mirror = _reference_mirror(prepared, input_ids1)
    ref_spec = _reference_spec(params, input_ids1)

    assert logits.shape == (BATCH, N_CLASSES)
    # Tight check: kernel implements exactly its (folded, bf16-weight) math.
    assert jnp.allclose(logits, ref_mirror, atol=1e-5, rtol=1e-5)
    # Semantic check vs the f32 spec path; the gap is solely bf16 weight /
    # activation storage (weights ~N(0, 0.02) => abs rounding ~1e-4 per entry).
    assert jnp.allclose(logits, ref_spec, atol=2e-3, rtol=0.0)

    print("KERNEL_OK")
</pallas_src>

<mosaic_0001>
module attributes {stable_mosaic.version = 11 : i64} {
  func.func @classifier_kernel(%arg0: memref<8xi32, #tpu.memory_space<smem>>, %arg1: memref<64x128xf32, #tpu.memory_space<vmem>>, %arg2: memref<256x128xbf16, #tpu.memory_space<vmem>>, %arg3: memref<2x128xf32, #tpu.memory_space<vmem>>, %arg4: memref<8x128xf32, #tpu.memory_space<vmem>>, %arg5: memref<8x128xf32, #tpu.memory_space<vmem>>) attributes {dimension_semantics = [], scalar_prefetch = 0 : i64, scratch_operands = 1 : i64, tpu.core_type = #tpu.core_type<tc>} {
    %c0 = arith.constant 0 : index
    %0 = memref.load %arg0[%c0] : memref<8xi32, #tpu.memory_space<smem>>
    %1 = arith.index_cast %0 : i32 to index
    %c0_0 = arith.constant 0 : index
    %2 = vector.load %arg1[%1, %c0_0] : memref<64x128xf32, #tpu.memory_space<vmem>>, vector<1x128xf32>
    %c0_1 = arith.constant 0 : index
    %c0_2 = arith.constant 0 : index
    %3 = vector.load %arg5[%c0_1, %c0_2] : memref<8x128xf32, #tpu.memory_space<vmem>>, vector<1x128xf32>
    tpu.vector_store %arg5[%c0_1, %c0_2], %2 {strides = array<i32>} : memref<8x128xf32, #tpu.memory_space<vmem>>, vector<1x128xf32>,
    %c1 = arith.constant 1 : index
    %4 = memref.load %arg0[%c1] : memref<8xi32, #tpu.memory_space<smem>>
    %5 = arith.index_cast %4 : i32 to index
    %c0_3 = arith.constant 0 : index
    %6 = vector.load %arg1[%5, %c0_3] : memref<64x128xf32, #tpu.memory_space<vmem>>, vector<1x128xf32>
    %c1_4 = arith.constant 1 : index
    %c0_5 = arith.constant 0 : index
    %7 = vector.load %arg5[%c1_4, %c0_5] : memref<8x128xf32, #tpu.memory_space<vmem>>, vector<1x128xf32>
    tpu.vector_store %arg5[%c1_4, %c0_5], %6 {strides = array<i32>} : memref<8x128xf32, #tpu.memory_space<vmem>>, vector<1x128xf32>,
    %c2 = arith.constant 2 : index
    %8 = memref.load %arg0[%c2] : memref<8xi32, #tpu.memory_space<smem>>
    %9 = arith.index_cast %8 : i32 to index
    %c0_6 = arith.constant 0 : index
    %10 = vector.load %arg1[%9, %c0_6] : memref<64x128xf32, #tpu.memory_space<vmem>>, vector<1x128xf32>
    %c2_7 = arith.constant 2 : index
    %c0_8 = arith.constant 0 : index
    %11 = vector.load %arg5[%c2_7, %c0_8] : memref<8x128xf32, #tpu.memory_space<vmem>>, vector<1x128xf32>
    tpu.vector_store %arg5[%c2_7, %c0_8], %10 {strides = array<i32>} : memref<8x128xf32, #tpu.memory_space<vmem>>, vector<1x128xf32>,
    %c3 = arith.constant 3 : index
    %12 = memref.load %arg0[%c3] : memref<8xi32, #tpu.memory_space<smem>>
    %13 = arith.index_cast %12 : i32 to index
    %c0_9 = arith.constant 0 : index
    %14 = vector.load %arg1[%13, %c0_9] : memref<64x128xf32, #tpu.memory_space<vmem>>, vector<1x128xf32>
    %c3_10 = arith.constant 3 : index
    %c0_11 = arith.constant 0 : index
    %15 = vector.load %arg5[%c3_10, %c0_11] : memref<8x128xf32, #tpu.memory_space<vmem>>, vector<1x128xf32>
    tpu.vector_store %arg5[%c3_10, %c0_11], %14 {strides = array<i32>} : memref<8x128xf32, #tpu.memory_space<vmem>>, vector<1x128xf32>,
    %c4 = arith.constant 4 : index
    %16 = memref.load %arg0[%c4] : memref<8xi32, #tpu.memory_space<smem>>
    %17 = arith.index_cast %16 : i32 to index
    %c0_12 = arith.constant 0 : index
    %18 = vector.load %arg1[%17, %c0_12] : memref<64x128xf32, #tpu.memory_space<vmem>>, vector<1x128xf32>
    %c4_13 = arith.constant 4 : index
    %c0_14 = arith.constant 0 : index
    %19 = vector.load %arg5[%c4_13, %c0_14] : memref<8x128xf32, #tpu.memory_space<vmem>>, vector<1x128xf32>
    tpu.vector_store %arg5[%c4_13, %c0_14], %18 {strides = array<i32>} : memref<8x128xf32, #tpu.memory_space<vmem>>, vector<1x128xf32>,
    %c5 = arith.constant 5 : index
    %20 = memref.load %arg0[%c5] : memref<8xi32, #tpu.memory_space<smem>>
    %21 = arith.index_cast %20 : i32 to index
    %c0_15 = arith.constant 0 : index
    %22 = vector.load %arg1[%21, %c0_15] : memref<64x128xf32, #tpu.memory_space<vmem>>, vector<1x128xf32>
    %c5_16 = arith.constant 5 : index
    %c0_17 = arith.constant 0 : index
    %23 = vector.load %arg5[%c5_16, %c0_17] : memref<8x128xf32, #tpu.memory_space<vmem>>, vector<1x128xf32>
    tpu.vector_store %arg5[%c5_16, %c0_17], %22 {strides = array<i32>} : memref<8x128xf32, #tpu.memory_space<vmem>>, vector<1x128xf32>,
    %c6 = arith.constant 6 : index
    %24 = memref.load %arg0[%c6] : memref<8xi32, #tpu.memory_space<smem>>
    %25 = arith.index_cast %24 : i32 to index
    %c0_18 = arith.constant 0 : index
    %26 = vector.load %arg1[%25, %c0_18] : memref<64x128xf32, #tpu.memory_space<vmem>>, vector<1x128xf32>
    %c6_19 = arith.constant 6 : index
    %c0_20 = arith.constant 0 : index
    %27 = vector.load %arg5[%c6_19, %c0_20] : memref<8x128xf32, #tpu.memory_space<vmem>>, vector<1x128xf32>
    tpu.vector_store %arg5[%c6_19, %c0_20], %26 {strides = array<i32>} : memref<8x128xf32, #tpu.memory_space<vmem>>, vector<1x128xf32>,
    %c7 = arith.constant 7 : index
    %28 = memref.load %arg0[%c7] : memref<8xi32, #tpu.memory_space<smem>>
    %29 = arith.index_cast %28 : i32 to index
    %c0_21 = arith.constant 0 : index
    %30 = vector.load %arg1[%29, %c0_21] : memref<64x128xf32, #tpu.memory_space<vmem>>, vector<1x128xf32>
    %c7_22 = arith.constant 7 : index
    %c0_23 = arith.constant 0 : index
    %31 = vector.load %arg5[%c7_22, %c0_23] : memref<8x128xf32, #tpu.memory_space<vmem>>, vector<1x128xf32>
    tpu.vector_store %arg5[%c7_22, %c0_23], %30 {strides = array<i32>} : memref<8x128xf32, #tpu.memory_space<vmem>>, vector<1x128xf32>,
    %c0_24 = arith.constant 0 : index
    %c0_25 = arith.constant 0 : index
    %32 = vector.load %arg5[%c0_24, %c0_25] : memref<8x128xf32, #tpu.memory_space<vmem>>, vector<8x128xf32>
    %33 = arith.truncf %32 : vector<8x128xf32> to vector<8x128xbf16>
    %c0_26 = arith.constant 0 : index
    %c0_27 = arith.constant 0 : index
    %34 = vector.load %arg2[%c0_26, %c0_27] : memref<256x128xbf16, #tpu.memory_space<vmem>>, vector<128x128xbf16>
    %c128 = arith.constant 128 : index
    %c0_28 = arith.constant 0 : index
    %35 = vector.load %arg2[%c128, %c0_28] : memref<256x128xbf16, #tpu.memory_space<vmem>>, vector<128x128xbf16>
    %cst = arith.constant dense<0.000000e+00> : vector<8x128xf32>
    %36 = tpu.matmul %33, %34, %cst {dimension_numbers = #tpu.dot_dimension_numbers<[1], [0], [0], [1], [0, 0, 1, 1], [], []>} : vector<8x128xbf16>, vector<128x128xbf16>, vector<8x128xf32> -> vector<8x128xf32>
    %c0_29 = arith.constant 0 : index
    %c0_30 = arith.constant 0 : index
    %37 = vector.load %arg3[%c0_29, %c0_30] : memref<2x128xf32, #tpu.memory_space<vmem>>, vector<1x128xf32>
    %38 = vector.broadcast %37 : vector<1x128xf32> to vector<8x128xf32>
    %39 = arith.addf %36, %38 : vector<8x128xf32>
    %cst_31 = arith.constant 0.000000e+00 : f32
    %40 = vector.broadcast %cst_31 : f32 to vector<8x128xf32>
    %41 = arith.maximumf %39, %40 : vector<8x128xf32>
    %42 = arith.truncf %41 : vector<8x128xf32> to vector<8x128xbf16>
    %cst_32 = arith.constant dense<0.000000e+00> : vector<8x128xf32>
    %43 = tpu.matmul %42, %35, %cst_32 {dimension_numbers = #tpu.dot_dimension_numbers<[1], [0], [0], [1], [0, 0, 1, 1], [], []>} : vector<8x128xbf16>, vector<128x128xbf16>, vector<8x128xf32> -> vector<8x128xf32>
    %c1_33 = arith.constant 1 : index
    %c0_34 = arith.constant 0 : index
    %44 = vector.load %arg3[%c1_33, %c0_34] : memref<2x128xf32, #tpu.memory_space<vmem>>, vector<1x128xf32>
    %45 = vector.broadcast %44 : vector<1x128xf32> to vector<8x128xf32>
    %46 = arith.addf %43, %45 : vector<8x128xf32>
    %c0_35 = arith.constant 0 : index
    %c0_36 = arith.constant 0 : index
    %47 = vector.load %arg4[%c0_35, %c0_36] : memref<8x128xf32, #tpu.memory_space<vmem>>, vector<8x128xf32>
    tpu.vector_store %arg4[%c0_35, %c0_36], %46 {strides = array<i32>} : memref<8x128xf32, #tpu.memory_space<vmem>>, vector<8x128xf32>,
    return
  }
}

</mosaic_0001>

<llo_original>
// kernel: hypothesis_classifier_forward.1
$region0: #{hypothesis_classifier_forward.1}
  #allocation0 [shape = 'u32[]', space=smem, size = 0x4, offset = 0x4, fixed_abs, tag = 'smem constant byte address 0x4 - core index']
  #allocation1 [shape = 'u32[144,128]{1,0:T(1,128)}', space=vmem, size = 0x12000, scoped, tag = 'internal scratch']
  #allocation2 [shape = 'f32[8,128]{1,0:T(8,128)}', space=vmem, size = 0x1000, scoped, tag = 'scratch operand']
  %s0 = inlined_call_operand.vmem [shape: s32[8], index: 0, kind: input, shape index: {}]
  %s1 = inlined_call_operand.hbm [shape: f32[64,128], index: 1, kind: input, shape index: {}]
  %s2 = inlined_call_operand.hbm [shape: bf16[256,128], index: 2, kind: input, shape index: {}]
  %s3 = inlined_call_operand.vmem [shape: f32[2,128], index: 3, kind: input, shape index: {}]
  %s4 = inlined_call_operand.vmem [shape: f32[8,128], index: 4, kind: output, shape index: {}]
  %s5 = sld [smem:[#allocation0]]
  $region38: #{hypothesis_classifier_forward.1} parent=0
    _
  %s7 = ssub.s32 1, %s5
  %s8 = scalar_select 0, %s7, %s5
  $region1: #{hypothesis_classifier_forward.1} parent=0
    #allocation3 [shape = 'u8[512]{0}', space=smem, size = 0x200, scoped, tag = 'input window, operand 0, single buffered']
    #allocation4 [shape = 's32[1]{0}', space=sflag, size = 0x4, scoped, tag = 'scoped memory for hypothesis_classifier_forward.1']
    #allocation5 [shape = 's32[1]{0}', space=sflag, size = 0x4, scoped, tag = 'scoped memory for hypothesis_classifier_forward.1']
    #allocation6 [shape = 'u8[32768]{0}', space=vmem, size = 0x8000, scoped, tag = 'input window, operand 1, single buffered']
    #allocation7 [shape = 'u8[65536]{0}', space=vmem, size = 0x10000, scoped, tag = 'input window, operand 2, single buffered']
    #allocation8 [shape = 's32[1]{0}', space=sflag, size = 0x4, scoped, tag = 'scoped memory for hypothesis_classifier_forward.1']
    %9 = vsyncpa [#allocation5], 0
    %10 = vsyncpa [#allocation4], 0
    %11 = vsyncpa [#allocation8], 0
    // Predicated region
    $region2: #{hypothesis_classifier_forward.1} parent=1 // pred_check
      _
    $region3: #{hypothesis_classifier_forward.1} parent=1 // pred_check_branch
      %13 = sbr.rel (0) target = $region5
    $region4: #{hypothesis_classifier_forward.1} parent=1 // pred_region
      %s15 = ssub.s32 16, 16
      %16 = vsyncadd [#allocation5], %s15
      %s18 = sshll.u32 %s0, 4
      %s19 = int_to_ptr.vmem [resolvable:$true] %s18
      %21 = dma.vmem_to_smem %s19, 16, [#allocation3], [#allocation5]
    $region5: #{hypothesis_classifier_forward.1} parent=1 // pred_fallthru
      _
    // Predicated region
    $region6: #{hypothesis_classifier_forward.1} parent=1 // pred_check
      _
    $region7: #{hypothesis_classifier_forward.1} parent=1 // pred_check_branch
      %23 = sbr.rel (0) target = $region9
    $region8: #{hypothesis_classifier_forward.1} parent=1 // pred_region
      %s25 = ssub.s32 1024, 1024
      %26 = vsyncadd [#allocation4], %s25
      %s27 = sshll.u32 [#allocation6], 4
      %s28 = int_to_ptr.vmem [resolvable:$true] %s27
      %33 = dma.hbm_to_vmem [thread:$0]  %s1, 1024, %s28, [#allocation4], 128, 128, 8
    $region9: #{hypothesis_classifier_forward.1} parent=1 // pred_fallthru
      _
    // Predicated region
    $region10: #{hypothesis_classifier_forward.1} parent=1 // pred_check
      _
    $region11: #{hypothesis_classifier_forward.1} parent=1 // pred_check_branch
      %35 = sbr.rel (0) target = $region13
    $region12: #{hypothesis_classifier_forward.1} parent=1 // pred_region
      %s37 = ssub.s32 2048, 2048
      %38 = vsyncadd [#allocation8], %s37
      %s39 = sshll.u32 [#allocation7], 4
      %s40 = int_to_ptr.vmem [resolvable:$true] %s39
      %45 = dma.hbm_to_vmem [thread:$0]  %s2, 2048, %s40, [#allocation8], 64, 64, 4
    $region13: #{hypothesis_classifier_forward.1} parent=1 // pred_fallthru
      _
    // Predicated region
    $region14: #{hypothesis_classifier_forward.1} parent=1 // pred_check
      _
    $region15: #{hypothesis_classifier_forward.1} parent=1 // pred_check_branch
      %47 = sbr.rel (0) target = $region17
    $region16: #{hypothesis_classifier_forward.1} parent=1 // pred_region
      _
    $region17: #{hypothesis_classifier_forward.1} parent=1 // pred_fallthru
      _
    // Predicated region
    $region18: #{hypothesis_classifier_forward.1} parent=1 // pred_check
      _
    $region19: #{hypothesis_classifier_forward.1} parent=1 // pred_check_branch
      %49 = sbr.rel (0) target = $region21
    $region20: #{hypothesis_classifier_forward.1} parent=1 // pred_region
      %50 = dma.done [#allocation5], 16
    $region21: #{hypothesis_classifier_forward.1} parent=1 // pred_fallthru
      _
    // Predicated region
    $region22: #{hypothesis_classifier_forward.1} parent=1 // pred_check
      _
    $region23: #{hypothesis_classifier_forward.1} parent=1 // pred_check_branch
      %52 = sbr.rel (0) target = $region25
    $region24: #{hypothesis_classifier_forward.1} parent=1 // pred_region
      %53 = dma.done [#allocation4], 1024
    $region25: #{hypothesis_classifier_forward.1} parent=1 // pred_fallthru
      _
    // Predicated region
    $region26: #{hypothesis_classifier_forward.1} parent=1 // pred_check
      _
    $region27: #{hypothesis_classifier_forward.1} parent=1 // pred_check_branch
      %55 = sbr.rel (0) target = $region29
    $region28: #{hypothesis_classifier_forward.1} parent=1 // pred_region
      %56 = dma.done [#allocation8], 2048
    $region29: #{hypothesis_classifier_forward.1} parent=1 // pred_fallthru
      _
    %57 = sfence
    %s59 = sld [smem:[#allocation3]]
    %s60 = scalar_lea.vmem [#allocation6], %s59
    %v61 = vld [vmem:[%s60] sm:$0x1]
    %62 = vst [vmem:[#allocation2] sm:$0x1] %v61
    %s63 = sld [smem:[#allocation3 + $0x1]]
    %s64 = scalar_lea.vmem [#allocation6], %s63
    %v65 = vld [vmem:[%s64] sm:$0x1]
    %66 = vst [vmem:[#allocation2 + $0x1] sm:$0x1] %v65
    %s67 = sld [smem:[#allocation3 + $0x2]]
    %s68 = scalar_lea.vmem [#allocation6], %s67
    %v69 = vld [vmem:[%s68] sm:$0x1]
    %70 = vst [vmem:[#allocation2 + $0x2] sm:$0x1] %v69
    %s71 = sld [smem:[#allocation3 + $0x3]]
    %s72 = scalar_lea.vmem [#allocation6], %s71
    %v73 = vld [vmem:[%s72] sm:$0x1]
    %74 = vst [vmem:[#allocation2 + $0x3] sm:$0x1] %v73
    %s75 = sld [smem:[#allocation3 + $0x4]]
    %s76 = scalar_lea.vmem [#allocation6], %s75
    %v77 = vld [vmem:[%s76] sm:$0x1]
    %78 = vst [vmem:[#allocation2 + $0x4] sm:$0x1] %v77
    %s79 = sld [smem:[#allocation3 + $0x5]]
    %s80 = scalar_lea.vmem [#allocation6], %s79
    %v81 = vld [vmem:[%s80] sm:$0x1]
    %82 = vst [vmem:[#allocation2 + $0x5] sm:$0x1] %v81
    %s83 = sld [smem:[#allocation3 + $0x6]]
    %s84 = scalar_lea.vmem [#allocation6], %s83
    %v85 = vld [vmem:[%s84] sm:$0x1]
    %86 = vst [vmem:[#allocation2 + $0x6] sm:$0x1] %v85
    %s87 = sld [smem:[#allocation3 + $0x7]]
    %s88 = scalar_lea.vmem [#allocation6], %s87
    %v89 = vld [vmem:[%s88] sm:$0x1]
    %90 = vst [vmem:[#allocation2 + $0x7] sm:$0x1] %v89
    %v91 = vld [vmem:[#allocation2] sm:$0xff]
    %v92 = vpack.c.bf16 %v91, %v91
    %v93 = vld [vmem:[#allocation7] sm:$0xf]
    %v94 = vld [vmem:[#allocation7 + $0x4] sm:$0xf]
    %v95 = vld [vmem:[#allocation7 + $0x8] sm:$0xf]
    %v96 = vld [vmem:[#allocation7 + $0xc] sm:$0xf]
    %v97 = vld [vmem:[#allocation7 + $0x10] sm:$0xf]
    %v98 = vld [vmem:[#allocation7 + $0x14] sm:$0xf]
    %v99 = vld [vmem:[#allocation7 + $0x18] sm:$0xf]
    %v100 = vld [vmem:[#allocation7 + $0x1c] sm:$0xf]
    %v101 = vld [vmem:[#allocation7 + $0x20] sm:$0xf]
    %v102 = vld [vmem:[#allocation7 + $0x24] sm:$0xf]
    %v103 = vld [vmem:[#allocation7 + $0x28] sm:$0xf]
    %v104 = vld [vmem:[#allocation7 + $0x2c] sm:$0xf]
    %v105 = vld [vmem:[#allocation7 + $0x30] sm:$0xf]
    %v106 = vld [vmem:[#allocation7 + $0x34] sm:$0xf]
    %v107 = vld [vmem:[#allocation7 + $0x38] sm:$0xf]
    %v108 = vld [vmem:[#allocation7 + $0x3c] sm:$0xf]
    %v109 = vld [vmem:[#allocation7 + $0x40] sm:$0xf]
    %v110 = vld [vmem:[#allocation7 + $0x44] sm:$0xf]
    %v111 = vld [vmem:[#allocation7 + $0x48] sm:$0xf]
    %v112 = vld [vmem:[#allocation7 + $0x4c] sm:$0xf]
    %v113 = vld [vmem:[#allocation7 + $0x50] sm:$0xf]
    %v114 = vld [vmem:[#allocation7 + $0x54] sm:$0xf]
    %v115 = vld [vmem:[#allocation7 + $0x58] sm:$0xf]
    %v116 = vld [vmem:[#allocation7 + $0x5c] sm:$0xf]
    %v117 = vld [vmem:[#allocation7 + $0x60] sm:$0xf]
    %v118 = vld [vmem:[#allocation7 + $0x64] sm:$0xf]
    %v119 = vld [vmem:[#allocation7 + $0x68] sm:$0xf]
    %v120 = vld [vmem:[#allocation7 + $0x6c] sm:$0xf]
    %v121 = vld [vmem:[#allocation7 + $0x70] sm:$0xf]
    %v122 = vld [vmem:[#allocation7 + $0x74] sm:$0xf]
    %v123 = vld [vmem:[#allocation7 + $0x78] sm:$0xf]
    %v124 = vld [vmem:[#allocation7 + $0x7c] sm:$0xf]
    %v125 = vld [vmem:[%s3] sm:$0x1]
    %v126 = vlaneseq
    %v127 = vshrl.u32 %v126, 7
    %v128 = vsub.s32 0, %v127
    %v129 = vrot.slane %v125, %v128
    %v146 = vunpack.c.l.b16 %v93
    %v147 = vunpack.c.l.b16 %v94
    %v148 = vunpack.c.l.b16 %v95
    %v149 = vunpack.c.l.b16 %v96
    %v150 = vunpack.c.l.b16 %v97
    %v151 = vunpack.c.l.b16 %v98
    %v152 = vunpack.c.l.b16 %v99
    %v153 = vunpack.c.l.b16 %v100
    %v154 = vunpack.c.l.b16 %v101
    %v155 = vunpack.c.l.b16 %v102
    %v156 = vunpack.c.l.b16 %v103
    %v157 = vunpack.c.l.b16 %v104
    %v158 = vunpack.c.l.b16 %v105
    %v159 = vunpack.c.l.b16 %v106
    %v160 = vunpack.c.l.b16 %v107
    %v161 = vunpack.c.l.b16 %v108
    %v162 = vpack.c.b16 %v147, %v146
    %v163 = vpack.c.b16 %v149, %v148
    %v164 = vpack.c.b16 %v151, %v150
    %v165 = vpack.c.b16 %v153, %v152
    %v166 = vpack.c.b16 %v155, %v154
    %v167 = vpack.c.b16 %v157, %v156
    %v168 = vpack.c.b16 %v159, %v158
    %v169 = vpack.c.b16 %v161, %v160
    %178 = vmatprep.subr.bf16.mxu0 0
    %179 = vmatpush1.bf16.msra.mxu0 %v169
    %180 = vmatprep.subr.bf16.mxu0 0
    %181 = vmatpush1.bf16.msra.mxu0 %v168
    %182 = vmatprep.subr.bf16.mxu0 0
    %183 = vmatpush1.bf16.msra.mxu0 %v167
    %184 = vmatprep.subr.bf16.mxu0 0
    %185 = vmatpush1.bf16.msra.mxu0 %v166
    %186 = vmatprep.subr.bf16.mxu0 0
    %187 = vmatpush1.bf16.msra.mxu0 %v165
    %188 = vmatprep.subr.bf16.mxu0 0
    %189 = vmatpush1.bf16.msra.mxu0 %v164
    %190 = vmatprep.subr.bf16.mxu0 0
    %191 = vmatpush1.bf16.msra.mxu0 %v163
    %192 = vmatprep.subr.bf16.mxu0 0
    %193 = vmatpush1.bf16.msra.mxu0 %v162
    %194 = vmatprep.subr.bf16.mxu0 0
    %195 = vmatpush2.bf16.msra.mxu0 0
    %196 = vmatprep.subr.bf16.mxu0 0
    %197 = vmatpush2.bf16.msra.mxu0 0
    %198 = vmatprep.subr.bf16.mxu0 0
    %199 = vmatpush2.bf16.msra.mxu0 0
    %200 = vmatprep.subr.bf16.mxu0 0
    %201 = vmatpush2.bf16.msra.mxu0 0
    %202 = vmatprep.subr.bf16.mxu0 0
    %203 = vmatpush2.bf16.msra.mxu0 0
    %204 = vmatprep.subr.bf16.mxu0 0
    %205 = vmatpush2.bf16.msra.mxu0 0
    %206 = vmatprep.subr.bf16.mxu0 0
    %207 = vmatpush2.bf16.msra.mxu0 0
    %208 = vmatprep.subr.bf16.mxu0 0
    %209 = vmatpush2.bf16.msra.mxu0 0
    %210 = vmatprep.mubr.bf16.mxu0 0
    %211 = vmatmul.mubr.bf16.gmra.mxu0 %v92
    %v212 = vpop.f32.mrf.mxu0
    %v213 = vadd.f32 %v129, %v212
    %v214 = vpop.f32.mrf.mxu0
    %v215 = vpop.f32.mrf.mxu0
    %v216 = vpop.f32.mrf.mxu0
    %217 = vdwg.mxu0
    %v218 = vmax.f32 %v213, 0.0
    %v219 = vpack.c.bf16 %v218, %v218
    %v220 = vld [vmem:[%s3 + $0x1] sm:$0x1]
    %v221 = vlaneseq
    %v222 = vshrl.u32 %v221, 7
    %v223 = vsub.s32 0, %v222
    %v224 = vrot.slane %v220, %v223
    %v241 = vunpack.c.l.b16 %v109
    %v242 = vunpack.c.l.b16 %v110
    %v243 = vunpack.c.l.b16 %v111
    %v244 = vunpack.c.l.b16 %v112
    %v245 = vunpack.c.l.b16 %v113
    %v246 = vunpack.c.l.b16 %v114
    %v247 = vunpack.c.l.b16 %v115
    %v248 = vunpack.c.l.b16 %v116
    %v249 = vunpack.c.l.b16 %v117
    %v250 = vunpack.c.l.b16 %v118
    %v251 = vunpack.c.l.b16 %v119
    %v252 = vunpack.c.l.b16 %v120
    %v253 = vunpack.c.l.b16 %v121
    %v254 = vunpack.c.l.b16 %v122
    %v255 = vunpack.c.l.b16 %v123
    %v256 = vunpack.c.l.b16 %v124
    %v257 = vpack.c.b16 %v242, %v241
    %v258 = vpack.c.b16 %v244, %v243
    %v259 = vpack.c.b16 %v246, %v245
    %v260 = vpack.c.b16 %v248, %v247
    %v261 = vpack.c.b16 %v250, %v249
    %v262 = vpack.c.b16 %v252, %v251
    %v263 = vpack.c.b16 %v254, %v253
    %v264 = vpack.c.b16 %v256, %v255
    %273 = vmatprep.subr.bf16.mxu0 0
    %274 = vmatpush1.bf16.msra.mxu0 %v264
    %275 = vmatprep.subr.bf16.mxu0 0
    %276 = vmatpush1.bf16.msra.mxu0 %v263
    %277 = vmatprep.subr.bf16.mxu0 0
    %278 = vmatpush1.bf16.msra.mxu0 %v262
    %279 = vmatprep.subr.bf16.mxu0 0
    %280 = vmatpush1.bf16.msra.mxu0 %v261
    %281 = vmatprep.subr.bf16.mxu0 0
    %282 = vmatpush1.bf16.msra.mxu0 %v260
    %283 = vmatprep.subr.bf16.mxu0 0
    %284 = vmatpush1.bf16.msra.mxu0 %v259
    %285 = vmatprep.subr.bf16.mxu0 0
    %286 = vmatpush1.bf16.msra.mxu0 %v258
    %287 = vmatprep.subr.bf16.mxu0 0
    %288 = vmatpush1.bf16.msra.mxu0 %v257
    %289 = vmatprep.subr.bf16.mxu0 0
    %290 = vmatpush2.bf16.msra.mxu0 0
    %291 = vmatprep.subr.bf16.mxu0 0
    %292 = vmatpush2.bf16.msra.mxu0 0
    %293 = vmatprep.subr.bf16.mxu0 0
    %294 = vmatpush2.bf16.msra.mxu0 0
    %295 = vmatprep.subr.bf16.mxu0 0
    %296 = vmatpush2.bf16.msra.mxu0 0
    %297 = vmatprep.subr.bf16.mxu0 0
    %298 = vmatpush2.bf16.msra.mxu0 0
    %299 = vmatprep.subr.bf16.mxu0 0
    %300 = vmatpush2.bf16.msra.mxu0 0
    %301 = vmatprep.subr.bf16.mxu0 0
    %302 = vmatpush2.bf16.msra.mxu0 0
    %303 = vmatprep.subr.bf16.mxu0 0
    %304 = vmatpush2.bf16.msra.mxu0 0
    %305 = vmatprep.mubr.bf16.mxu0 0
    %306 = vmatmul.mubr.bf16.gmra.mxu0 %v219
    %v307 = vpop.f32.mrf.mxu0
    %v308 = vadd.f32 %v224, %v307
    %v309 = vpop.f32.mrf.mxu0
    %v310 = vpop.f32.mrf.mxu0
    %v311 = vpop.f32.mrf.mxu0
    %312 = vdwg.mxu0
    %313 = vst [vmem:[%s4] sm:$0xff] %v308
    // Predicated region
    $region30: #{hypothesis_classifier_forward.1} parent=1 // pred_check
      _
    $region31: #{hypothesis_classifier_forward.1} parent=1 // pred_check_branch
      %315 = sbr.rel (0) target = $region33
    $region32: #{hypothesis_classifier_forward.1} parent=1 // pred_region
      _
    $region33: #{hypothesis_classifier_forward.1} parent=1 // pred_fallthru
      _
    // Predicated region
    $region34: #{hypothesis_classifier_forward.1} parent=1 // pred_check
      _
    $region35: #{hypothesis_classifier_forward.1} parent=1 // pred_check_branch
      %317 = sbr.rel (0) target = $region37
    $region36: #{hypothesis_classifier_forward.1} parent=1 // pred_region
      _
    $region37: #{hypothesis_classifier_forward.1} parent=1 // pred_fallthru
      _
    %318 = vsyncpa [#allocation4], 1
    %319 = vsyncpa [#allocation8], 1
    %320 = vsyncpa [#allocation5], 1

</llo_original>
